<compile_context>
chip_gen: v7x
topology: tpu7x:2x2x1
jax: 0.10.0
libtpu: 0.0.40
codegen_flags: <defaults>
</compile_context>

<pallas_src>
import jax
import jax.numpy as jnp
from jax.experimental import pallas as pl
from jax.experimental.pallas import tpu as pltpu

_LANE = 128


def _round_up(a, b):
    return (a + b - 1) // b * b


def _make_single_step_kernel(hw_total):
    """grid_hw == 1: no accumulator, reduce + scale + matmul + store directly."""
    inv_hw = 1.0 / float(hw_total)

    def kernel(x_ref, w_ref, o_ref):
        x = x_ref[...].astype(jnp.float32)                   # (n_blk, C, HW)
        pooled = jnp.sum(x, axis=-1) * inv_hw                # (n_blk, C)
        # dropout(p=0.2) is identity in eval mode
        w = w_ref[...].astype(jnp.float32)                   # (C, cls_pad)
        o_ref[0] = jnp.dot(pooled, w,
                           preferred_element_type=jnp.float32).astype(o_ref.dtype)

    return kernel


def _make_multi_step_kernel(hw_total, hw_blk, needs_mask):
    """HW reduction over grid axis 2, optional 2-way split over grid axis 0."""
    inv_hw = 1.0 / float(hw_total)

    def kernel(x_ref, w_ref, o_ref, acc_ref):
        # x_ref:  (n_blk, C, hw_blk)  VMEM tile
        # w_ref:  (C, cls_pad)        VMEM, grid-invariant
        # o_ref:  (1, n_blk, cls_pad) VMEM, invariant along the HW grid axis
        # acc_ref:(n_blk, C) f32      VMEM scratch (tiny)
        c = pl.program_id(0)                    # HW split index (0 or 0/1)
        h = pl.program_id(2)                    # HW tile within this split
        n_hw = pl.num_programs(2)

        @pl.when(h == 0)
        def _init():
            acc_ref[...] = jnp.zeros_like(acc_ref)

        x = x_ref[...].astype(jnp.float32)      # (n_blk, C, hw_blk)
        g = c * n_hw + h                        # global (unclamped) HW tile index

        if needs_mask:
            # Only the edge tile(s) (partial tail / fully-out-of-range split
            # remainder) pay for the iota + compare + select; all full tiles
            # take the cheap branch.
            is_edge = (g + 1) * hw_blk > hw_total

            @pl.when(jnp.logical_not(is_edge))
            def _full():
                acc_ref[...] += jnp.sum(x, axis=-1)

            @pl.when(is_edge)
            def _edge():
                pos = jax.lax.broadcasted_iota(jnp.int32, x.shape, 2) + g * hw_blk
                acc_ref[...] += jnp.sum(jnp.where(pos < hw_total, x, 0.0), axis=-1)
        else:
            acc_ref[...] += jnp.sum(x, axis=-1)

        @pl.when(h == n_hw - 1)
        def _finalize():
            pooled = acc_ref[...] * inv_hw                   # (n_blk, C)
            # dropout(p=0.2) is identity in eval mode
            w = w_ref[...].astype(jnp.float32)               # (C, cls_pad)
            o_ref[0] = jnp.dot(pooled, w,
                               preferred_element_type=jnp.float32).astype(o_ref.dtype)

    return kernel


def fine_grained_classifier(x, conv_weight):
    """x: (N, C, H, W) float32/bfloat16; conv_weight: (cls_num, C, 1, 1)."""
    N, C, H, W = x.shape
    cls_num = conv_weight.shape[0]
    HW = H * W
    elem = jnp.dtype(x.dtype).itemsize

    # ---- N blocking: output block 2nd-to-last dim must be %8 or == N -------
    if N <= 8:
        n_candidates = [N]                       # full-N block (any size)
    else:
        n_candidates = [c for c in (32, 16, 8) if c <= N]   # multiples of 8

    # ---- HW blocking: fat lane-dense tiles under an explicit VMEM budget ----
    X_TOTAL_BUDGET = 32 * 1024 * 1024            # both x pipeline buffers
    per_buf = X_TOTAL_BUDGET // 2                # 16 MiB per x buffer
    HW_CAP = 4096                                # lanes per tile cap
    HW_TARGET = min(512, _round_up(HW, _LANE))   # don't bother exceeding HW

    def hw_cap_for(nb):
        return (per_buf // max(1, nb * C * elem)) // _LANE * _LANE

    # Prefer the largest n_blk that still allows hw_blk >= HW_TARGET; otherwise
    # fall back to the smallest legal n_blk (shrink n_blk before hw_blk).
    n_blk = n_candidates[-1]
    for cand in n_candidates:
        if hw_cap_for(cand) >= HW_TARGET:
            n_blk = cand
            break

    cap = hw_cap_for(n_blk)
    if HW <= max(cap, _LANE):
        hw_blk = HW                              # single HW tile (full dim OK)
    else:
        # cap can still be < 128 for pathological n_blk*C; 128 is the hard
        # floor for a lane-aligned tile (budget slightly exceeded, accepted).
        hw_blk = max(_LANE, min(cap, HW_CAP))

    grid_n = pl.cdiv(N, n_blk)
    grid_hw = pl.cdiv(HW, hw_blk)
    single_step = (grid_hw == 1)

    # ---- split the HW reduction over 2 cores (v7x) when N gives no ||ism ----
    n_splits = 2 if (grid_n == 1 and grid_hw >= 2) else 1
    hw_tiles = pl.cdiv(grid_hw, n_splits)        # HW tiles per split
    needs_mask = (n_splits * hw_tiles * hw_blk != HW)

    # ---- lane-dense output: pad cls_num up to a multiple of 128 -------------
    cls_pad = max(_LANE, _round_up(cls_num, _LANE))
    w_t = conv_weight.reshape(cls_num, C).T.astype(jnp.float32)   # (C, cls)
    if cls_pad != cls_num:
        w_t = jnp.pad(w_t, ((0, 0), (0, cls_pad - cls_num)))

    # ---- VMEM accounting: x(2 bufs) + w(2 bufs) + out(2 bufs) + acc ---------
    vmem_need = (2 * n_blk * C * hw_blk * elem
                 + 2 * C * cls_pad * 4
                 + 2 * n_blk * cls_pad * elem
                 + _round_up(n_blk, 8) * _round_up(C, _LANE) * 4)
    vmem_limit = int(min(64 * 1024 * 1024,
                         max(32 * 1024 * 1024, vmem_need + 8 * 1024 * 1024)))

    if single_step:
        kernel = _make_single_step_kernel(HW)
        scratch_shapes = []
    else:
        kernel = _make_multi_step_kernel(HW, hw_blk, needs_mask)
        scratch_shapes = [pltpu.VMEM((n_blk, C), jnp.float32)]

    if n_splits == 1:
        x_map = lambda c, n, h: (n, 0, h)
    else:
        last_tile = grid_hw - 1

        def x_map(c, n, h):
            # Clamp the split remainder tile back in-bounds; its contribution
            # is zeroed in-kernel via the global-position mask.
            return (n, 0, jnp.minimum(c * hw_tiles + h, last_tile))

    out = pl.pallas_call(
        kernel,
        out_shape=jax.ShapeDtypeStruct((n_splits, N, cls_pad), x.dtype),
        grid_spec=pltpu.PrefetchScalarGridSpec(
            num_scalar_prefetch=0,
            grid=(n_splits, grid_n, hw_tiles),
            in_specs=[
                pl.BlockSpec((n_blk, C, hw_blk), x_map),
                pl.BlockSpec((C, cls_pad), lambda c, n, h: (0, 0)),
            ],
            out_specs=pl.BlockSpec((1, n_blk, cls_pad), lambda c, n, h: (c, n, 0)),
            scratch_shapes=scratch_shapes,
        ),
        compiler_params=pltpu.CompilerParams(
            dimension_semantics=("parallel", "parallel", "arbitrary"),
            vmem_limit_bytes=vmem_limit,
        ),
    )(x.reshape(N, C, HW), w_t)

    # Combine the (linear) per-split partial results and drop lane padding.
    out = out[0] if n_splits == 1 else jnp.sum(out, axis=0)
    out = out[:, :cls_num]

    # dropout(p=0.2) is identity in eval mode
    # TODO(synk): training-mode dropout masking/scaling (pltpu.prng_*) not implemented

    # Reproduce `x.squeeze()` on the (N, cls_num, 1, 1) conv output, followed by
    # `if x.size(0) == 200: x = x.unsqueeze(0)` (static shapes -> Python).
    full_shape = (N, cls_num, 1, 1)
    squeezed_shape = tuple(d for d in full_shape if d != 1)
    out = out.reshape(squeezed_shape if squeezed_shape else ())
    if out.ndim >= 1 and out.shape[0] == 200:
        out = out[None]
    return out


if __name__ == "__main__":
    key = jax.random.PRNGKey(0)
    k_x, k_w = jax.random.split(key)

    N, C, H, W = 2, 4, 16, 16          # batch=2, input_dim=4, spatial=16x16
    CLS = 16                           # cls_num=16

    x = jax.random.normal(k_x, (N, C, H, W), dtype=jnp.float32)
    # deterministic "conv" weight, shape (cls_num, input_dim, 1, 1), no bias
    conv_weight = (jax.random.normal(k_w, (CLS, C, 1, 1), dtype=jnp.float32)
                   * (1.0 / jnp.sqrt(C)))

    out = fine_grained_classifier(x, conv_weight)
    out = jax.block_until_ready(out)

    # pure-JAX reference for correctness
    pooled_ref = jnp.mean(x, axis=(2, 3))                        # (N, C)
    ref = pooled_ref @ conv_weight.reshape(CLS, C).T             # (N, CLS)
    assert out.shape == ref.shape, (out.shape, ref.shape)
    assert jnp.allclose(out, ref, atol=1e-5, rtol=1e-5), float(
        jnp.max(jnp.abs(out - ref)))

    print("KERNEL_OK")
</pallas_src>

<mosaic_0001>
module attributes {stable_mosaic.version = 11 : i64} {
  func.func @kernel(%arg0: i32, %arg1: i32, %arg2: i32, %arg3: memref<2x4x256xf32, #tpu.memory_space<vmem>>, %arg4: memref<4x128xf32, #tpu.memory_space<vmem>>, %arg5: memref<1x2x128xf32, #tpu.memory_space<vmem>>) attributes {dimension_semantics = [#tpu.dimension_semantics<parallel>, #tpu.dimension_semantics<parallel>, #tpu.dimension_semantics<arbitrary>], iteration_bounds = array<i64: 1, 1, 1>, scalar_prefetch = 0 : i64, scratch_operands = 0 : i64, tpu.core_type = #tpu.core_type<tc>, window_params = [{transform_indices = @transform_0, window_bounds = array<i64: 2, 4, 256>}, {pipeline_mode = #tpu.pipeline_mode<synchronous>, transform_indices = @transform_1, window_bounds = array<i64: 4, 128>}, {transform_indices = @transform_2, window_bounds = array<i64: 1, 2, 128>}]} {
    %c0 = arith.constant 0 : index
    %c0_0 = arith.constant 0 : index
    %c0_1 = arith.constant 0 : index
    %0 = vector.load %arg3[%c0, %c0_0, %c0_1] : memref<2x4x256xf32, #tpu.memory_space<vmem>>, vector<2x4x256xf32>
    %cst = arith.constant dense<0.000000e+00> : vector<2x4xf32>
    %1 = vector.multi_reduction <add>, %0, %cst [2] : vector<2x4x256xf32> to vector<2x4xf32>
    %cst_2 = arith.constant 3.906250e-03 : f32
    %2 = vector.broadcast %cst_2 : f32 to vector<2x4xf32>
    %3 = arith.mulf %1, %2 : vector<2x4xf32>
    %c0_3 = arith.constant 0 : index
    %c0_4 = arith.constant 0 : index
    %4 = vector.load %arg4[%c0_3, %c0_4] : memref<4x128xf32, #tpu.memory_space<vmem>>, vector<4x128xf32>
    %cst_5 = arith.constant dense<0.000000e+00> : vector<2x128xf32>
    %5 = tpu.matmul %3, %4, %cst_5 {dimension_numbers = #tpu.dot_dimension_numbers<[1], [0], [0], [1], [0, 0, 1, 1], [], []>} : vector<2x4xf32>, vector<4x128xf32>, vector<2x128xf32> -> vector<2x128xf32>
    %c0_6 = arith.constant 0 : index
    %c0_7 = arith.constant 0 : index
    %c0_8 = arith.constant 0 : index
    %6 = vector.load %arg5[%c0_6, %c0_7, %c0_8] : memref<1x2x128xf32, #tpu.memory_space<vmem>>, vector<1x2x128xf32>
    %7 = vector.shape_cast %6 : vector<1x2x128xf32> to vector<2x128xf32>
    %8 = vector.shape_cast %5 : vector<2x128xf32> to vector<1x2x128xf32>
    tpu.vector_store %arg5[%c0_6, %c0_7, %c0_8], %8 {strides = array<i32>} : memref<1x2x128xf32, #tpu.memory_space<vmem>>, vector<1x2x128xf32>,
    return
  }
  func.func @transform_0(%arg0: i32, %arg1: i32, %arg2: i32) -> (i32, i32, i32) {
    %c0_i32 = arith.constant 0 : i32
    %c0_i32_0 = arith.constant 0 : i32
    return %arg1, %c0_i32, %arg2 : i32, i32, i32
  }
  func.func @transform_1(%arg0: i32, %arg1: i32, %arg2: i32) -> (i32, i32) {
    %c0_i32 = arith.constant 0 : i32
    %c0_i32_0 = arith.constant 0 : i32
    %c0_i32_1 = arith.constant 0 : i32
    return %c0_i32, %c0_i32_0 : i32, i32
  }
  func.func @transform_2(%arg0: i32, %arg1: i32, %arg2: i32) -> (i32, i32, i32) {
    %c0_i32 = arith.constant 0 : i32
    %c0_i32_0 = arith.constant 0 : i32
    return %arg0, %arg1, %c0_i32 : i32, i32, i32
  }
}

</mosaic_0001>

<llo_original>
// kernel: tpu_custom_call.1
$region0: #{tpu_custom_call.1}
  #allocation0 [shape = 'u32[]', space=smem, size = 0x4, offset = 0x4, fixed_abs, tag = 'smem constant byte address 0x4 - core index']
  #allocation1 [shape = 'u32[144,128]{1,0:T(1,128)}', space=vmem, size = 0x12000, scoped, tag = 'internal scratch']
  %s0 = inlined_call_operand.hbm [shape: f32[2,4,256], index: 0, kind: input, shape index: {}]
  %s1 = inlined_call_operand.hbm [shape: f32[4,128], index: 1, kind: input, shape index: {}]
  %s2 = inlined_call_operand.hbm [shape: f32[1,2,128], index: 2, kind: output, shape index: {}]
  %s3 = sld [smem:[#allocation0]]
  $region26: #{tpu_custom_call.1} parent=0
    _
  %s5 = ssub.s32 1, %s3
  %s6 = scalar_select 0, %s5, %s3
  $region1: #{tpu_custom_call.1} parent=0
    #allocation2 [shape = 'u8[8192]{0}', space=vmem, size = 0x2000, scoped, tag = 'input window, operand 0, single buffered']
    #allocation3 [shape = 's32[1]{0}', space=sflag, size = 0x4, scoped, tag = 'scoped memory for tpu_custom_call.1']
    #allocation4 [shape = 's32[1]{0}', space=sflag, size = 0x4, scoped, tag = 'scoped memory for tpu_custom_call.1']
    #allocation5 [shape = 'u8[2048]{0}', space=vmem, size = 0x800, scoped, tag = 'input window, operand 1, single buffered']
    #allocation6 [shape = 's32[1]{0}', space=sflag, size = 0x4, scoped, tag = 'scoped memory for tpu_custom_call.1']
    #allocation7 [shape = 'u8[1024]{0}', space=vmem, size = 0x400, scoped, tag = 'output window, operand 0, single buffered']
    %7 = vsyncpa [#allocation3], 0
    %8 = vsyncpa [#allocation6], 0
    %9 = vsyncpa [#allocation4], 0
    // Predicated region
    $region2: #{tpu_custom_call.1} parent=1 // pred_check
      _
    $region3: #{tpu_custom_call.1} parent=1 // pred_check_branch
      %11 = sbr.rel (0) target = $region5
    $region4: #{tpu_custom_call.1} parent=1 // pred_region
      %s13 = ssub.s32 256, 256
      %14 = vsyncadd [#allocation3], %s13
      %s15 = sshll.u32 [#allocation2], 4
      %s16 = int_to_ptr.vmem [resolvable:$true] %s15
      %21 = dma.hbm_to_vmem [thread:$0]  %s0, 256, %s16, [#allocation3], 128, 128, 8
    $region5: #{tpu_custom_call.1} parent=1 // pred_fallthru
      _
    // Predicated region
    $region6: #{tpu_custom_call.1} parent=1 // pred_check
      _
    $region7: #{tpu_custom_call.1} parent=1 // pred_check_branch
      %23 = sbr.rel (0) target = $region9
    $region8: #{tpu_custom_call.1} parent=1 // pred_region
      %s25 = ssub.s32 64, 64
      %26 = vsyncadd [#allocation6], %s25
      %s28 = sshll.u32 [#allocation5], 4
      %s29 = int_to_ptr.vmem [resolvable:$true] %s28
      %31 = dma.hbm_to_vmem [thread:$0]  %s1, 64, %s29, [#allocation6]
    $region9: #{tpu_custom_call.1} parent=1 // pred_fallthru
      _
    // Predicated region
    $region10: #{tpu_custom_call.1} parent=1 // pred_check
      _
    $region11: #{tpu_custom_call.1} parent=1 // pred_check_branch
      %33 = sbr.rel (0) target = $region13
    $region12: #{tpu_custom_call.1} parent=1 // pred_region
      %34 = dma.done [#allocation3], 256
    $region13: #{tpu_custom_call.1} parent=1 // pred_fallthru
      _
    // Predicated region
    $region14: #{tpu_custom_call.1} parent=1 // pred_check
      _
    $region15: #{tpu_custom_call.1} parent=1 // pred_check_branch
      %36 = sbr.rel (0) target = $region17
    $region16: #{tpu_custom_call.1} parent=1 // pred_region
      %37 = dma.done [#allocation6], 64
    $region17: #{tpu_custom_call.1} parent=1 // pred_fallthru
      _
    %v38 = vld [vmem:[#allocation2] sm:$0xff]
    %v39 = vld [vmem:[#allocation2 + $0x8] sm:$0xff]
    %v42 = vcombine.high %v38, %v38
    %v43 = vcombine.high %v39, %v39
    %vm46 = vcmask 1043456
    %v47 = vsel %vm46, %v38, 0.0
    %v48 = vsel %vm46, %v42, 0.0
    %v49 = vadd.f32 %v47, %v48
    %50 = vadd.xlane.f32.xlu0 %v49
    %v51 = vpop.xlane.xlu0 %50
    %v52 = vsel %vm46, %v39, 0.0
    %v53 = vsel %vm46, %v43, 0.0
    %v54 = vadd.f32 %v52, %v53
    %55 = vadd.xlane.f32.xlu0 %v54
    %v56 = vpop.xlane.xlu0 %55
    %v57 = vmul.f32 %v51, 0.00390625
    %v58 = vmul.f32 %v56, 0.00390625
    %v59 = vld [vmem:[#allocation5] sm:$0xf]
    %v62 = vlaneseq
    %v63 = vand.u32 %v62, 127
    %v64 = vlaneseq
    %v65 = vshrl.u32 %v64, 7
    %v66 = vsub.s32 %v63, %v65
    %v67 = vrot.slane %v57, %v66
    %v68 = vlaneseq
    %v69 = vshrl.u32 %v68, 7
    %v70 = vsub.s32 %v63, %v69
    %v71 = vrot.slane %v58, %v70
    %vm72 = vcmask 1041409
    %v73 = vsel %vm72, %v71, %v67
    %vm74 = vcmask 31744
    %v75 = vsel %vm74, %v73, 0
    %v78 = vsel %vm46, %v59, 0
    %80 = vmatprep.subr.mxu0 0.0
    %81 = vmatpush1.msra.mxu0 %v78
    %82 = vmatprep.subr.mxu0 0.0
    %83 = vmatpush1.msra.mxu0 0.0
    %84 = vmatprep.subr.mxu0 0.0
    %85 = vmatpush1.msra.mxu0 0.0
    %86 = vmatprep.subr.mxu0 0.0
    %87 = vmatpush1.msra.mxu0 0.0
    %88 = vmatprep.subr.mxu0 0.0
    %89 = vmatpush1.msra.mxu0 0.0
    %90 = vmatprep.subr.mxu0 0.0
    %91 = vmatpush1.msra.mxu0 0.0
    %92 = vmatprep.subr.mxu0 0.0
    %93 = vmatpush1.msra.mxu0 0.0
    %94 = vmatprep.subr.mxu0 0.0
    %95 = vmatpush1.msra.mxu0 0.0
    %96 = vmatprep.subr.mxu0 0.0
    %97 = vmatpush1.msra.mxu0 0.0
    %98 = vmatprep.subr.mxu0 0.0
    %99 = vmatpush1.msra.mxu0 0.0
    %100 = vmatprep.subr.mxu0 0.0
    %101 = vmatpush1.msra.mxu0 0.0
    %102 = vmatprep.subr.mxu0 0.0
    %103 = vmatpush1.msra.mxu0 0.0
    %104 = vmatprep.subr.mxu0 0.0
    %105 = vmatpush1.msra.mxu0 0.0
    %106 = vmatprep.subr.mxu0 0.0
    %107 = vmatpush1.msra.mxu0 0.0
    %108 = vmatprep.subr.mxu0 0.0
    %109 = vmatpush1.msra.mxu0 0.0
    %110 = vmatprep.subr.mxu0 0.0
    %111 = vmatpush1.msra.mxu0 0.0
    %112 = vmatprep.subr.mxu0 0.0
    %113 = vmatpush1.msra.mxu0 0.0
    %114 = vmatprep.subr.mxu0 0.0
    %115 = vmatpush1.msra.mxu0 0.0
    %116 = vmatprep.subr.mxu0 0.0
    %117 = vmatpush1.msra.mxu0 0.0
    %118 = vmatprep.subr.mxu0 0.0
    %119 = vmatpush1.msra.mxu0 0.0
    %120 = vmatprep.subr.mxu0 0.0
    %121 = vmatpush1.msra.mxu0 0.0
    %122 = vmatprep.subr.mxu0 0.0
    %123 = vmatpush1.msra.mxu0 0.0
    %124 = vmatprep.subr.mxu0 0.0
    %125 = vmatpush1.msra.mxu0 0.0
    %126 = vmatprep.subr.mxu0 0.0
    %127 = vmatpush1.msra.mxu0 0.0
    %128 = vmatprep.subr.mxu0 0.0
    %129 = vmatpush1.msra.mxu0 0.0
    %130 = vmatprep.subr.mxu0 0.0
    %131 = vmatpush1.msra.mxu0 0.0
    %132 = vmatprep.subr.mxu0 0.0
    %133 = vmatpush1.msra.mxu0 0.0
    %134 = vmatprep.subr.mxu0 0.0
    %135 = vmatpush1.msra.mxu0 0.0
    %136 = vmatprep.subr.mxu0 0.0
    %137 = vmatpush1.msra.mxu0 0.0
    %138 = vmatprep.subr.mxu0 0.0
    %139 = vmatpush1.msra.mxu0 0.0
    %140 = vmatprep.subr.mxu0 0.0
    %141 = vmatpush1.msra.mxu0 0.0
    %142 = vmatprep.subr.mxu0 0.0
    %143 = vmatpush1.msra.mxu0 0.0
    %144 = vmatprep.mubr.f32.mxu0 0.0
    %145 = vmatmul.mubr.f32.gmra.mrb[0].mxu0 %v75
    %v146 = vpop.f32.mrb[0].mxu0
    %v147 = vadd.f32 0.0, %v146
    %v148 = vpop.f32.mrb[0].mxu0
    %149 = vdwg.mxu0
    %150 = vst [vmem:[#allocation7] sm:$0x3] %v147
    // Predicated region
    $region18: #{tpu_custom_call.1} parent=1 // pred_check
      _
    $region19: #{tpu_custom_call.1} parent=1 // pred_check_branch
      %152 = sbr.rel (0) target = $region21
    $region20: #{tpu_custom_call.1} parent=1 // pred_region
      %s154 = ssub.s32 32, 32
      %155 = vsyncadd [#allocation4], %s154
      %s157 = sshll.u32 [#allocation7], 4
      %s158 = int_to_ptr.vmem [resolvable:$true] %s157
      %160 = dma.vmem_to_hbm [thread:$0]  %s158, 32, %s2, [#allocation4]
    $region21: #{tpu_custom_call.1} parent=1 // pred_fallthru
      _
    // Predicated region
    $region22: #{tpu_custom_call.1} parent=1 // pred_check
      _
    $region23: #{tpu_custom_call.1} parent=1 // pred_check_branch
      %162 = sbr.rel (0) target = $region25
    $region24: #{tpu_custom_call.1} parent=1 // pred_region
      %163 = dma.done [#allocation4], 32
    $region25: #{tpu_custom_call.1} parent=1 // pred_fallthru
      _
    %164 = vsyncpa [#allocation3], 1
    %165 = vsyncpa [#allocation6], 1
    %166 = vsyncpa [#allocation4], 1

</llo_original>
